<compile_context>
chip_gen: v5e
topology: v5e:2x2
jax: 0.10.0
libtpu: 0.0.40
codegen_flags: <defaults>
</compile_context>

<pallas_src>
import jax
import jax.numpy as jnp
from jax import lax
from jax.experimental import pallas as pl
from jax.experimental.pallas import tpu as pltpu


def mlp_kernel(x_ref, w1_ref, b1_ref, w2_ref, b2_ref, w3r_ref, b3_ref, o_ref):
    # fc1 + ReLU  (dropout1: identity at inference)
    h1 = jnp.dot(x_ref[...], w1_ref[...], preferred_element_type=jnp.float32)
    h1 = jnp.maximum(h1 + b1_ref[...], 0.0)
    # fc2 + ReLU  (dropout2 / dropout3: identity at inference)
    h2 = jnp.dot(h1.astype(w2_ref.dtype), w2_ref[...],
                 preferred_element_type=jnp.float32)
    h2 = jnp.maximum(h2 + b2_ref[...], 0.0)
    # fc4 + sigmoid, computed as (1, 8) . (tile_b, 8)^T -> (1, tile_b) so the output
    # tile is lane-dense (no (tile_b, 1) column / masked stores).  M=1,K=8 MXU work
    # is free; XLU/VPU have slack so this stays a dot_general.
    logits = lax.dot_general(
        w3r_ref[...], h2,
        dimension_numbers=(((1,), (1,)), ((), ())),
        preferred_element_type=jnp.float32,
    ) + b3_ref[...]
    o_ref[0] = jax.nn.sigmoid(logits)


def _round_up(x, m):
    return ((x + m - 1) // m) * m


def _cdiv(a, b):
    return -(-a // b)


def simple_nn_forward(x, params, *, tile_b_max=16384, stream_dtype=jnp.bfloat16,
                      x_buffers=2, min_tiles=4, vmem_cap_bytes=48 << 20):
    """x: [B, input_dim] float32. params: dict of (w1,b1,w2,b2,w3,b3). Returns [B, 1].

    stream_dtype: dtype used to stream x and hold w1/w2 (bf16 halves HBM traffic;
    use jnp.float32 for bit-accurate f32 semantics).  Accumulation is always f32.
    """
    B, D = x.shape
    itemsize = jnp.dtype(stream_dtype).itemsize
    d_pad = _round_up(D, 128)  # the (tile_b, D) block occupies 128 lanes minimum

    # ---- batch tiling: multiples of 128 so the (1, tile_b) output store is dense ----
    b_pad128 = _round_up(B, 128)
    tile_b = min(max(128, (tile_b_max // 128) * 128), b_pad128)
    # Keep >= min_tiles grid steps when the batch is big enough, so the "parallel"
    # batch axis can shard across both TensorCores on v7x.
    if b_pad128 >= min_tiles * 128:
        tile_b = min(tile_b, _round_up(_cdiv(b_pad128, min_tiles), 128))

    def vmem_estimate(tb):
        x_buf = x_buffers * tb * d_pad * itemsize          # streamed x (lane-padded)
        out_buf = 2 * 8 * tb * 4                           # (1,1,tb) f32, sublane pad to 8
        w_res = (_round_up(D, 8) * 128 * itemsize          # w1 (resident)
                 + 16 * 128 * itemsize                     # w2 (resident)
                 + 4 * 8 * 128 * 4)                        # b1, b2, w3r, b3 (f32)
        return x_buf + out_buf + w_res

    # Shrink tile until a 2x-headroom estimate fits under the cap (v7x: 64 MiB/TC).
    while tile_b > 128 and 2 * vmem_estimate(tile_b) > vmem_cap_bytes:
        tile_b = max(128, ((tile_b // 2) // 128) * 128)

    b_pad = _round_up(B, tile_b)
    num_tiles = b_pad // tile_b
    if b_pad != B:
        x = jnp.pad(x, ((0, b_pad - B), (0, 0)))

    x_s = x.astype(stream_dtype)
    w1 = params["w1"].astype(stream_dtype)
    w2 = params["w2"].astype(stream_dtype)
    b1, b2 = params["b1"], params["b2"]
    # Layout plumbing only: present fc4's weight as a (1, 8) f32 row so the kernel
    # emits a lane-dense (1, tile_b) result directly.
    w3r = params["w3"].reshape(1, -1).astype(jnp.float32)
    b3 = params["b3"].reshape(1, 1).astype(jnp.float32)

    vmem_limit = int(min(max(2 * vmem_estimate(tile_b), 16 << 20), vmem_cap_bytes))

    x_spec_kwargs = {}
    if x_buffers != 2:
        # Deeper pipelining of the streamed x only (never the resident weights).
        x_spec_kwargs["pipeline_mode"] = pl.Buffered(x_buffers)

    out = pl.pallas_call(
        mlp_kernel,
        out_shape=jax.ShapeDtypeStruct((num_tiles, 1, tile_b), jnp.float32),
        grid=(num_tiles,),
        in_specs=[
            pl.BlockSpec((tile_b, D), lambda i: (i, 0), **x_spec_kwargs),  # x: streamed
            pl.BlockSpec((D, 16), lambda i: (0, 0)),   # w1: resident in VMEM
            pl.BlockSpec((1, 16), lambda i: (0, 0)),   # b1: resident
            pl.BlockSpec((16, 8), lambda i: (0, 0)),   # w2: resident
            pl.BlockSpec((1, 8), lambda i: (0, 0)),    # b2: resident
            pl.BlockSpec((1, 8), lambda i: (0, 0)),    # w3 (row, f32): resident
            pl.BlockSpec((1, 1), lambda i: (0, 0)),    # b3: resident
        ],
        out_specs=pl.BlockSpec((1, 1, tile_b), lambda i: (i, 0, 0)),
        compiler_params=pltpu.CompilerParams(
            dimension_semantics=("parallel",),
            vmem_limit_bytes=vmem_limit,
        ),
    )(x_s, w1, b1, w2, b2, w3r, b3)

    # (num_tiles, 1, tile_b) -> flat [b_pad] -> [B, 1]  (padded rows sliced off)
    return out.reshape(-1)[:B].reshape(B, 1)


def init_params(key, input_dim):
    """Deterministic init mimicking nn.Linear default (uniform +-1/sqrt(fan_in))."""
    ks = jax.random.split(key, 6)

    def linear(kw, kb, fan_in, fan_out):
        bound = 1.0 / jnp.sqrt(jnp.float32(fan_in))
        w = jax.random.uniform(kw, (fan_in, fan_out), jnp.float32, -bound, bound)
        b = jax.random.uniform(kb, (1, fan_out), jnp.float32, -bound, bound)
        return w, b

    w1, b1 = linear(ks[0], ks[1], input_dim, 16)
    w2, b2 = linear(ks[2], ks[3], 16, 8)
    w3, b3 = linear(ks[4], ks[5], 8, 1)
    return {"w1": w1, "b1": b1, "w2": w2, "b2": b2, "w3": w3, "b3": b3}


def _reference(x, params):
    h1 = jnp.maximum(x @ params["w1"] + params["b1"], 0.0)
    h2 = jnp.maximum(h1 @ params["w2"] + params["b2"], 0.0)
    return jax.nn.sigmoid(h2 @ params["w3"] + params["b3"])


if __name__ == "__main__":
    key = jax.random.PRNGKey(0)
    k_x, k_x2, k_p = jax.random.split(key, 3)

    batch, input_dim = 8, 32
    x = jax.random.normal(k_x, (batch, input_dim), jnp.float32)
    params = init_params(k_p, input_dim)
    ref = _reference(x, params)

    # 1) Default (bf16-streaming) path.
    out = jax.block_until_ready(simple_nn_forward(x, params))
    assert out.shape == (batch, 1)
    assert jnp.allclose(out, ref, atol=2e-2, rtol=0.0)

    # 2) Multi-tile pipelined path + tail padding: 300 rows, forced 128-row tiles.
    x2 = jax.random.normal(k_x2, (300, input_dim), jnp.float32)
    out2 = jax.block_until_ready(simple_nn_forward(x2, params, tile_b_max=128))
    ref2 = _reference(x2, params)
    assert out2.shape == (300, 1)
    assert jnp.allclose(out2, ref2, atol=2e-2, rtol=0.0)

    # 3) Bit-accurate f32 streaming path.
    out3 = jax.block_until_ready(
        simple_nn_forward(x, params, stream_dtype=jnp.float32))
    assert jnp.allclose(out3, ref, atol=1e-5, rtol=1e-5)

    print("KERNEL_OK")
</pallas_src>

<mosaic_0001>
module attributes {stable_mosaic.version = 11 : i64} {
  func.func @mlp_kernel(%arg0: i32, %arg1: memref<128x32xbf16, #tpu.memory_space<vmem>>, %arg2: memref<32x16xbf16, #tpu.memory_space<vmem>>, %arg3: memref<1x16xf32, #tpu.memory_space<vmem>>, %arg4: memref<16x8xbf16, #tpu.memory_space<vmem>>, %arg5: memref<1x8xf32, #tpu.memory_space<vmem>>, %arg6: memref<1x8xf32, #tpu.memory_space<vmem>>, %arg7: memref<1x1xf32, #tpu.memory_space<vmem>>, %arg8: memref<1x1x128xf32, #tpu.memory_space<vmem>>) attributes {dimension_semantics = [#tpu.dimension_semantics<parallel>], iteration_bounds = array<i64: 1>, scalar_prefetch = 0 : i64, scratch_operands = 0 : i64, tpu.core_type = #tpu.core_type<tc>, window_params = [{transform_indices = @transform_0, window_bounds = array<i64: 128, 32>}, {pipeline_mode = #tpu.pipeline_mode<synchronous>, transform_indices = @transform_1, window_bounds = array<i64: 32, 16>}, {pipeline_mode = #tpu.pipeline_mode<synchronous>, transform_indices = @transform_2, window_bounds = array<i64: 1, 16>}, {pipeline_mode = #tpu.pipeline_mode<synchronous>, transform_indices = @transform_3, window_bounds = array<i64: 16, 8>}, {pipeline_mode = #tpu.pipeline_mode<synchronous>, transform_indices = @transform_4, window_bounds = array<i64: 1, 8>}, {pipeline_mode = #tpu.pipeline_mode<synchronous>, transform_indices = @transform_5, window_bounds = array<i64: 1, 8>}, {pipeline_mode = #tpu.pipeline_mode<synchronous>, transform_indices = @transform_6, window_bounds = array<i64: 1, 1>}, {transform_indices = @transform_7, window_bounds = array<i64: 1, 1, 128>}]} {
    %c0 = arith.constant 0 : index
    %c0_0 = arith.constant 0 : index
    %0 = vector.load %arg1[%c0, %c0_0] : memref<128x32xbf16, #tpu.memory_space<vmem>>, vector<128x32xbf16>
    %c0_1 = arith.constant 0 : index
    %c0_2 = arith.constant 0 : index
    %1 = vector.load %arg2[%c0_1, %c0_2] : memref<32x16xbf16, #tpu.memory_space<vmem>>, vector<32x16xbf16>
    %cst = arith.constant dense<0.000000e+00> : vector<128x16xf32>
    %2 = tpu.matmul %0, %1, %cst {dimension_numbers = #tpu.dot_dimension_numbers<[1], [0], [0], [1], [0, 0, 1, 1], [], []>} : vector<128x32xbf16>, vector<32x16xbf16>, vector<128x16xf32> -> vector<128x16xf32>
    %c0_3 = arith.constant 0 : index
    %c0_4 = arith.constant 0 : index
    %3 = vector.load %arg3[%c0_3, %c0_4] : memref<1x16xf32, #tpu.memory_space<vmem>>, vector<1x16xf32>
    %4 = vector.broadcast %3 : vector<1x16xf32> to vector<128x16xf32>
    %5 = arith.addf %2, %4 : vector<128x16xf32>
    %cst_5 = arith.constant 0.000000e+00 : f32
    %6 = vector.broadcast %cst_5 : f32 to vector<128x16xf32>
    %7 = arith.maximumf %5, %6 : vector<128x16xf32>
    %8 = arith.truncf %7 : vector<128x16xf32> to vector<128x16xbf16>
    %c0_6 = arith.constant 0 : index
    %c0_7 = arith.constant 0 : index
    %9 = vector.load %arg4[%c0_6, %c0_7] : memref<16x8xbf16, #tpu.memory_space<vmem>>, vector<16x8xbf16>
    %cst_8 = arith.constant dense<0.000000e+00> : vector<128x8xf32>
    %10 = tpu.matmul %8, %9, %cst_8 {dimension_numbers = #tpu.dot_dimension_numbers<[1], [0], [0], [1], [0, 0, 1, 1], [], []>} : vector<128x16xbf16>, vector<16x8xbf16>, vector<128x8xf32> -> vector<128x8xf32>
    %c0_9 = arith.constant 0 : index
    %c0_10 = arith.constant 0 : index
    %11 = vector.load %arg5[%c0_9, %c0_10] : memref<1x8xf32, #tpu.memory_space<vmem>>, vector<1x8xf32>
    %12 = vector.broadcast %11 : vector<1x8xf32> to vector<128x8xf32>
    %13 = arith.addf %10, %12 : vector<128x8xf32>
    %cst_11 = arith.constant 0.000000e+00 : f32
    %14 = vector.broadcast %cst_11 : f32 to vector<128x8xf32>
    %15 = arith.maximumf %13, %14 : vector<128x8xf32>
    %c0_12 = arith.constant 0 : index
    %c0_13 = arith.constant 0 : index
    %16 = vector.load %arg6[%c0_12, %c0_13] : memref<1x8xf32, #tpu.memory_space<vmem>>, vector<1x8xf32>
    %cst_14 = arith.constant dense<0.000000e+00> : vector<1x128xf32>
    %17 = tpu.matmul %16, %15, %cst_14 {dimension_numbers = #tpu.dot_dimension_numbers<[1], [1], [0], [0], [0, 0, 1, 0], [], []>} : vector<1x8xf32>, vector<128x8xf32>, vector<1x128xf32> -> vector<1x128xf32>
    %c0_15 = arith.constant 0 : index
    %c0_16 = arith.constant 0 : index
    %18 = vector.load %arg7[%c0_15, %c0_16] : memref<1x1xf32, #tpu.memory_space<vmem>>, vector<1x1xf32>
    %19 = vector.broadcast %18 : vector<1x1xf32> to vector<1x128xf32>
    %20 = arith.addf %17, %19 : vector<1x128xf32>
    %21 = arith.negf %20 : vector<1x128xf32>
    %22 = math.exp %21 : vector<1x128xf32>
    %cst_17 = arith.constant 1.000000e+00 : f32
    %23 = vector.broadcast %cst_17 : f32 to vector<1x128xf32>
    %24 = arith.addf %23, %22 : vector<1x128xf32>
    %25 = arith.divf %23, %24 : vector<1x128xf32>
    %c0_18 = arith.constant 0 : index
    %c0_19 = arith.constant 0 : index
    %c0_20 = arith.constant 0 : index
    %26 = vector.load %arg8[%c0_18, %c0_19, %c0_20] : memref<1x1x128xf32, #tpu.memory_space<vmem>>, vector<1x1x128xf32>
    %27 = vector.shape_cast %26 : vector<1x1x128xf32> to vector<1x128xf32>
    %28 = vector.shape_cast %25 : vector<1x128xf32> to vector<1x1x128xf32>
    tpu.vector_store %arg8[%c0_18, %c0_19, %c0_20], %28 {strides = array<i32>} : memref<1x1x128xf32, #tpu.memory_space<vmem>>, vector<1x1x128xf32>,
    return
  }
  func.func @transform_0(%arg0: i32) -> (i32, i32) {
    %c0_i32 = arith.constant 0 : i32
    %c0_i32_0 = arith.constant 0 : i32
    return %arg0, %c0_i32 : i32, i32
  }
  func.func @transform_1(%arg0: i32) -> (i32, i32) {
    %c0_i32 = arith.constant 0 : i32
    %c0_i32_0 = arith.constant 0 : i32
    %c0_i32_1 = arith.constant 0 : i32
    return %c0_i32, %c0_i32_0 : i32, i32
  }
  func.func @transform_2(%arg0: i32) -> (i32, i32) {
    %c0_i32 = arith.constant 0 : i32
    %c0_i32_0 = arith.constant 0 : i32
    %c0_i32_1 = arith.constant 0 : i32
    return %c0_i32, %c0_i32_0 : i32, i32
  }
  func.func @transform_3(%arg0: i32) -> (i32, i32) {
    %c0_i32 = arith.constant 0 : i32
    %c0_i32_0 = arith.constant 0 : i32
    %c0_i32_1 = arith.constant 0 : i32
    return %c0_i32, %c0_i32_0 : i32, i32
  }
  func.func @transform_4(%arg0: i32) -> (i32, i32) {
    %c0_i32 = arith.constant 0 : i32
    %c0_i32_0 = arith.constant 0 : i32
    %c0_i32_1 = arith.constant 0 : i32
    return %c0_i32, %c0_i32_0 : i32, i32
  }
  func.func @transform_5(%arg0: i32) -> (i32, i32) {
    %c0_i32 = arith.constant 0 : i32
    %c0_i32_0 = arith.constant 0 : i32
    %c0_i32_1 = arith.constant 0 : i32
    return %c0_i32, %c0_i32_0 : i32, i32
  }
  func.func @transform_6(%arg0: i32) -> (i32, i32) {
    %c0_i32 = arith.constant 0 : i32
    %c0_i32_0 = arith.constant 0 : i32
    %c0_i32_1 = arith.constant 0 : i32
    return %c0_i32, %c0_i32_0 : i32, i32
  }
  func.func @transform_7(%arg0: i32) -> (i32, i32, i32) {
    %c0_i32 = arith.constant 0 : i32
    %c0_i32_0 = arith.constant 0 : i32
    %c0_i32_1 = arith.constant 0 : i32
    return %arg0, %c0_i32, %c0_i32_0 : i32, i32, i32
  }
}

</mosaic_0001>

<llo_original>
// kernel: tpu_custom_call.1
$region0: #{tpu_custom_call.1}
  #allocation0 [shape = 'u32[]', space=smem, size = 0x4, offset = 0x4, fixed_abs, tag = 'smem constant byte address 0x4 - core index']
  #allocation1 [shape = 'u32[72,128]{1,0:T(1,128)}', space=vmem, size = 0x9000, scoped, tag = 'internal scratch']
  #allocation2 [shape = 'f32[1,1]{1,0:T(1,128)S(1)}', space=vmem, size = 0x200, scoped, tag = 'scoped memory for tpu_custom_call.1']
  %s0 = inlined_call_operand.vmem [shape: bf16[128,32], index: 0, kind: input, shape index: {}]
  %s1 = inlined_call_operand.vmem [shape: bf16[32,16], index: 1, kind: input, shape index: {}]
  %s2 = inlined_call_operand.vmem [shape: f32[1,16], index: 2, kind: input, shape index: {}]
  %s3 = inlined_call_operand.vmem [shape: bf16[16,8], index: 3, kind: input, shape index: {}]
  %s4 = inlined_call_operand.vmem [shape: f32[1,8], index: 4, kind: input, shape index: {}]
  %s5 = inlined_call_operand.vmem [shape: f32[1,8], index: 5, kind: input, shape index: {}]
  %s6 = inlined_call_operand.<no memory space> [shape: f32[1,1], index: 6, kind: input, shape index: {}]
  %s7 = inlined_call_operand.hbm [shape: f32[1,1,128], index: 7, kind: output, shape index: {}]
  %s8 = sld [smem:[#allocation0]]
  $region38: #{tpu_custom_call.1} parent=0
    _
  %s10 = ssub.s32 1, %s8
  %s11 = scalar_select 0, %s10, %s8
  %v12 = vstv %s6
  %13 = vst [vmem:[#allocation2] sm:$0x1] %v12
  $region1: #{tpu_custom_call.1} parent=0
    #allocation3 [shape = 'u8[512]{0}', space=vmem, size = 0x400, scoped, tag = 'output window, operand 0, single buffered']
    #allocation4 [shape = 's32[1]{0}', space=sflag, size = 0x4, scoped, tag = 'scoped memory for tpu_custom_call.1']
    %14 = vsyncpa [#allocation4], 0
    // Predicated region
    $region2: #{tpu_custom_call.1} parent=1 // pred_check
      _
    $region3: #{tpu_custom_call.1} parent=1 // pred_check_branch
      %16 = sbr.rel (0) target = $region5
    $region4: #{tpu_custom_call.1} parent=1 // pred_region
      _
    $region5: #{tpu_custom_call.1} parent=1 // pred_fallthru
      _
    // Predicated region
    $region6: #{tpu_custom_call.1} parent=1 // pred_check
      _
    $region7: #{tpu_custom_call.1} parent=1 // pred_check_branch
      %18 = sbr.rel (0) target = $region9
    $region8: #{tpu_custom_call.1} parent=1 // pred_region
      _
    $region9: #{tpu_custom_call.1} parent=1 // pred_fallthru
      _
    // Predicated region
    $region10: #{tpu_custom_call.1} parent=1 // pred_check
      _
    $region11: #{tpu_custom_call.1} parent=1 // pred_check_branch
      %20 = sbr.rel (0) target = $region13
    $region12: #{tpu_custom_call.1} parent=1 // pred_region
      _
    $region13: #{tpu_custom_call.1} parent=1 // pred_fallthru
      _
    // Predicated region
    $region14: #{tpu_custom_call.1} parent=1 // pred_check
      _
    $region15: #{tpu_custom_call.1} parent=1 // pred_check_branch
      %22 = sbr.rel (0) target = $region17
    $region16: #{tpu_custom_call.1} parent=1 // pred_region
      _
    $region17: #{tpu_custom_call.1} parent=1 // pred_fallthru
      _
    // Predicated region
    $region18: #{tpu_custom_call.1} parent=1 // pred_check
      _
    $region19: #{tpu_custom_call.1} parent=1 // pred_check_branch
      %24 = sbr.rel (0) target = $region21
    $region20: #{tpu_custom_call.1} parent=1 // pred_region
      _
    $region21: #{tpu_custom_call.1} parent=1 // pred_fallthru
      _
    // Predicated region
    $region22: #{tpu_custom_call.1} parent=1 // pred_check
      _
    $region23: #{tpu_custom_call.1} parent=1 // pred_check_branch
      %26 = sbr.rel (0) target = $region25
    $region24: #{tpu_custom_call.1} parent=1 // pred_region
      _
    $region25: #{tpu_custom_call.1} parent=1 // pred_fallthru
      _
    // Predicated region
    $region26: #{tpu_custom_call.1} parent=1 // pred_check
      _
    $region27: #{tpu_custom_call.1} parent=1 // pred_check_branch
      %28 = sbr.rel (0) target = $region29
    $region28: #{tpu_custom_call.1} parent=1 // pred_region
      _
    $region29: #{tpu_custom_call.1} parent=1 // pred_fallthru
      _
    %v30 = vld [vmem:[%s0] sm:$0xf]
    %v31 = vld [vmem:[%s0 + $0x4] sm:$0xf]
    %v32 = vld [vmem:[%s0 + $0x8] sm:$0xf]
    %v33 = vld [vmem:[%s0 + $0xc] sm:$0xf]
    %v34 = vld [vmem:[%s0 + $0x10] sm:$0xf]
    %v35 = vld [vmem:[%s0 + $0x14] sm:$0xf]
    %v36 = vld [vmem:[%s0 + $0x18] sm:$0xf]
    %v37 = vld [vmem:[%s0 + $0x1c] sm:$0xf]
    %v38 = vld [vmem:[%s0 + $0x20] sm:$0xf]
    %v39 = vld [vmem:[%s0 + $0x24] sm:$0xf]
    %v40 = vld [vmem:[%s0 + $0x28] sm:$0xf]
    %v41 = vld [vmem:[%s0 + $0x2c] sm:$0xf]
    %v42 = vld [vmem:[%s0 + $0x30] sm:$0xf]
    %v43 = vld [vmem:[%s0 + $0x34] sm:$0xf]
    %v44 = vld [vmem:[%s0 + $0x38] sm:$0xf]
    %v45 = vld [vmem:[%s0 + $0x3c] sm:$0xf]
    %v46 = vld [vmem:[%s1] sm:$0xf]
    %v47 = vld [vmem:[%s1 + $0x4] sm:$0xf]
    %v48 = vld [vmem:[%s1 + $0x8] sm:$0xf]
    %v49 = vld [vmem:[%s1 + $0xc] sm:$0xf]
    %v50 = vld [vmem:[%s2] sm:$0x1]
    %v52 = vperm.slane %v50, 0
    %v70 = vunpack.c.l.b16 %v30
    %v71 = vunpack.c.l.b16 %v31
    %v72 = vunpack.c.l.b16 %v32
    %v73 = vunpack.c.l.b16 %v33
    %v74 = vunpack.c.l.b16 %v34
    %v75 = vunpack.c.l.b16 %v35
    %v76 = vunpack.c.l.b16 %v36
    %v77 = vunpack.c.l.b16 %v37
    %v78 = vunpack.c.l.b16 %v38
    %v79 = vunpack.c.l.b16 %v39
    %v80 = vunpack.c.l.b16 %v40
    %v81 = vunpack.c.l.b16 %v41
    %v82 = vunpack.c.l.b16 %v42
    %v83 = vunpack.c.l.b16 %v43
    %v84 = vunpack.c.l.b16 %v44
    %v85 = vunpack.c.l.b16 %v45
    %v86 = vpack.c.b16 %v71, %v70
    %v87 = vpack.c.b16 %v73, %v72
    %v88 = vpack.c.b16 %v75, %v74
    %v89 = vpack.c.b16 %v77, %v76
    %v90 = vpack.c.b16 %v79, %v78
    %v91 = vpack.c.b16 %v81, %v80
    %v92 = vpack.c.b16 %v83, %v82
    %v93 = vpack.c.b16 %v85, %v84
    %v98 = vunpack.c.l.b16 %v46
    %v99 = vunpack.c.l.b16 %v47
    %v100 = vunpack.c.l.b16 %v48
    %v101 = vunpack.c.l.b16 %v49
    %v102 = vpack.c.b16 %v99, %v98
    %v103 = vpack.c.b16 %v101, %v100
    %vm106 = vcmask 261120
    %v108 = vsel %vm106, %v86, 0
    %v111 = vsel %vm106, %v87, 0
    %v114 = vsel %vm106, %v88, 0
    %v117 = vsel %vm106, %v89, 0
    %v120 = vsel %vm106, %v90, 0
    %v123 = vsel %vm106, %v91, 0
    %v126 = vsel %vm106, %v92, 0
    %v129 = vsel %vm106, %v93, 0
    %131 = vmatpush.bf16.msra.mxu0 0
    %132 = vmatpush.bf16.msra.mxu0 0
    %133 = vmatpush.bf16.msra.mxu0 0
    %134 = vmatpush.bf16.msra.mxu0 0
    %135 = vmatpush.bf16.msra.mxu0 0
    %136 = vmatpush.bf16.msra.mxu0 0
    %137 = vmatpush.bf16.msra.mxu0 %v103
    %138 = vmatpush.bf16.msra.mxu0 %v102
    %139 = vmatmul.bf16.gmra.mxu0 %v108
    %v140 = vpop.f32.mrf.mxu0
    %v141 = vadd.f32 %v52, %v140
    %v142 = vpop.f32.mrf.mxu0
    %v143 = vadd.f32 %v52, %v142
    %144 = vmatmul.bf16.gmra.mxu0 %v111
    %v145 = vpop.f32.mrf.mxu0
    %v146 = vadd.f32 %v52, %v145
    %v147 = vpop.f32.mrf.mxu0
    %v148 = vadd.f32 %v52, %v147
    %149 = vmatmul.bf16.gmra.mxu0 %v114
    %v150 = vpop.f32.mrf.mxu0
    %v151 = vadd.f32 %v52, %v150
    %v152 = vpop.f32.mrf.mxu0
    %v153 = vadd.f32 %v52, %v152
    %154 = vmatmul.bf16.gmra.mxu0 %v117
    %v155 = vpop.f32.mrf.mxu0
    %v156 = vadd.f32 %v52, %v155
    %v157 = vpop.f32.mrf.mxu0
    %v158 = vadd.f32 %v52, %v157
    %159 = vmatmul.bf16.gmra.mxu0 %v120
    %v160 = vpop.f32.mrf.mxu0
    %v161 = vadd.f32 %v52, %v160
    %v162 = vpop.f32.mrf.mxu0
    %v163 = vadd.f32 %v52, %v162
    %164 = vmatmul.bf16.gmra.mxu0 %v123
    %v165 = vpop.f32.mrf.mxu0
    %v166 = vadd.f32 %v52, %v165
    %v167 = vpop.f32.mrf.mxu0
    %v168 = vadd.f32 %v52, %v167
    %169 = vmatmul.bf16.gmra.mxu0 %v126
    %v170 = vpop.f32.mrf.mxu0
    %v171 = vadd.f32 %v52, %v170
    %v172 = vpop.f32.mrf.mxu0
    %v173 = vadd.f32 %v52, %v172
    %174 = vmatmul.bf16.gmra.mxu0 %v129
    %v175 = vpop.f32.mrf.mxu0
    %v176 = vadd.f32 %v52, %v175
    %v177 = vpop.f32.mrf.mxu0
    %v178 = vadd.f32 %v52, %v177
    %179 = vdwg.mxu0
    %v180 = vmax.f32 %v141, 0.0
    %v181 = vmax.f32 %v143, 0.0
    %v182 = vmax.f32 %v146, 0.0
    %v183 = vmax.f32 %v148, 0.0
    %v184 = vmax.f32 %v151, 0.0
    %v185 = vmax.f32 %v153, 0.0
    %v186 = vmax.f32 %v156, 0.0
    %v187 = vmax.f32 %v158, 0.0
    %v188 = vmax.f32 %v161, 0.0
    %v189 = vmax.f32 %v163, 0.0
    %v190 = vmax.f32 %v166, 0.0
    %v191 = vmax.f32 %v168, 0.0
    %v192 = vmax.f32 %v171, 0.0
    %v193 = vmax.f32 %v173, 0.0
    %v194 = vmax.f32 %v176, 0.0
    %v195 = vmax.f32 %v178, 0.0
    %v196 = vpack.c.bf16 %v181, %v180
    %v197 = vpack.c.bf16 %v183, %v182
    %v198 = vpack.c.bf16 %v185, %v184
    %v199 = vpack.c.bf16 %v187, %v186
    %v200 = vpack.c.bf16 %v189, %v188
    %v201 = vpack.c.bf16 %v191, %v190
    %v202 = vpack.c.bf16 %v193, %v192
    %v203 = vpack.c.bf16 %v195, %v194
    %v204 = vld [vmem:[%s3] sm:$0xf]
    %v205 = vld [vmem:[%s3 + $0x4] sm:$0xf]
    %v206 = vld [vmem:[%s4] sm:$0x1]
    %v208 = vperm.slane %v206, 0
    %v212 = vunpack.c.l.b16 %v204
    %v213 = vunpack.c.l.b16 %v205
    %v214 = vpack.c.b16 %v213, %v212
    %vm216 = vcmask 130048
    %v218 = vsel %vm216, %v196, 0
    %v221 = vsel %vm216, %v197, 0
    %v224 = vsel %vm216, %v198, 0
    %v227 = vsel %vm216, %v199, 0
    %v230 = vsel %vm216, %v200, 0
    %v233 = vsel %vm216, %v201, 0
    %v236 = vsel %vm216, %v202, 0
    %v239 = vsel %vm216, %v203, 0
    %241 = vmatpush.bf16.msra.mxu0 0
    %242 = vmatpush.bf16.msra.mxu0 0
    %243 = vmatpush.bf16.msra.mxu0 0
    %244 = vmatpush.bf16.msra.mxu0 0
    %245 = vmatpush.bf16.msra.mxu0 0
    %246 = vmatpush.bf16.msra.mxu0 0
    %247 = vmatpush.bf16.msra.mxu0 0
    %248 = vmatpush.bf16.msra.mxu0 %v214
    %249 = vmatmul.bf16.gmra.mxu0 %v218
    %v250 = vpop.f32.mrf.mxu0
    %v251 = vadd.f32 %v208, %v250
    %v252 = vpop.f32.mrf.mxu0
    %v253 = vadd.f32 %v208, %v252
    %254 = vmatmul.bf16.gmra.mxu0 %v221
    %v255 = vpop.f32.mrf.mxu0
    %v256 = vadd.f32 %v208, %v255
    %v257 = vpop.f32.mrf.mxu0
    %v258 = vadd.f32 %v208, %v257
    %259 = vmatmul.bf16.gmra.mxu0 %v224
    %v260 = vpop.f32.mrf.mxu0
    %v261 = vadd.f32 %v208, %v260
    %v262 = vpop.f32.mrf.mxu0
    %v263 = vadd.f32 %v208, %v262
    %264 = vmatmul.bf16.gmra.mxu0 %v227
    %v265 = vpop.f32.mrf.mxu0
    %v266 = vadd.f32 %v208, %v265
    %v267 = vpop.f32.mrf.mxu0
    %v268 = vadd.f32 %v208, %v267
    %269 = vmatmul.bf16.gmra.mxu0 %v230
    %v270 = vpop.f32.mrf.mxu0
    %v271 = vadd.f32 %v208, %v270
    %v272 = vpop.f32.mrf.mxu0
    %v273 = vadd.f32 %v208, %v272
    %274 = vmatmul.bf16.gmra.mxu0 %v233
    %v275 = vpop.f32.mrf.mxu0
    %v276 = vadd.f32 %v208, %v275
    %v277 = vpop.f32.mrf.mxu0
    %v278 = vadd.f32 %v208, %v277
    %279 = vmatmul.bf16.gmra.mxu0 %v236
    %v280 = vpop.f32.mrf.mxu0
    %v281 = vadd.f32 %v208, %v280
    %v282 = vpop.f32.mrf.mxu0
    %v283 = vadd.f32 %v208, %v282
    %284 = vmatmul.bf16.gmra.mxu0 %v239
    %v285 = vpop.f32.mrf.mxu0
    %v286 = vadd.f32 %v208, %v285
    %v287 = vpop.f32.mrf.mxu0
    %v288 = vadd.f32 %v208, %v287
    %289 = vdwg.mxu0
    %v290 = vmax.f32 %v251, 0.0
    %v291 = vmax.f32 %v253, 0.0
    %v292 = vmax.f32 %v256, 0.0
    %v293 = vmax.f32 %v258, 0.0
    %v294 = vmax.f32 %v261, 0.0
    %v295 = vmax.f32 %v263, 0.0
    %v296 = vmax.f32 %v266, 0.0
    %v297 = vmax.f32 %v268, 0.0
    %v298 = vmax.f32 %v271, 0.0
    %v299 = vmax.f32 %v273, 0.0
    %v300 = vmax.f32 %v276, 0.0
    %v301 = vmax.f32 %v278, 0.0
    %v302 = vmax.f32 %v281, 0.0
    %v303 = vmax.f32 %v283, 0.0
    %v304 = vmax.f32 %v286, 0.0
    %v305 = vmax.f32 %v288, 0.0
    %v306 = vld [vmem:[%s5] sm:$0x1]
    %v307 = vld [vmem:[#allocation2] sm:$0x1]
    %309 = vset.pattern.permute.xlu0 0
    %310 = vperm.xlu0 %309, %v307
    %v311 = vpop.permute.xlu0 %310
    %v313 = vperm.slane %v311, 0
    %vm314 = vcmask 64512
    %v316 = vsel %vm314, %v306, 0
    %v319 = vsel %vm314, %v290, 0
    %v322 = vsel %vm314, %v291, 0
    %v325 = vsel %vm314, %v292, 0
    %v328 = vsel %vm314, %v293, 0
    %v331 = vsel %vm314, %v294, 0
    %v334 = vsel %vm314, %v295, 0
    %v337 = vsel %vm314, %v296, 0
    %v340 = vsel %vm314, %v297, 0
    %v343 = vsel %vm314, %v298, 0
    %v346 = vsel %vm314, %v299, 0
    %v349 = vsel %vm314, %v300, 0
    %v352 = vsel %vm314, %v301, 0
    %v355 = vsel %vm314, %v302, 0
    %v358 = vsel %vm314, %v303, 0
    %v361 = vsel %vm314, %v304, 0
    %v364 = vsel %vm314, %v305, 0
    %366 = vmatpush.xpose.msra.mxu0 %v364
    %367 = vmatpush.xpose.msra.mxu0 %v361
    %368 = vmatpush.xpose.msra.mxu0 %v358
    %369 = vmatpush.xpose.msra.mxu0 %v355
    %370 = vmatpush.xpose.msra.mxu0 %v352
    %371 = vmatpush.xpose.msra.mxu0 %v349
    %372 = vmatpush.xpose.msra.mxu0 %v346
    %373 = vmatpush.xpose.msra.mxu0 %v343
    %374 = vmatpush.xpose.msra.mxu0 %v340
    %375 = vmatpush.xpose.msra.mxu0 %v337
    %376 = vmatpush.xpose.msra.mxu0 %v334
    %377 = vmatpush.xpose.msra.mxu0 %v331
    %378 = vmatpush.xpose.msra.mxu0 %v328
    %379 = vmatpush.xpose.msra.mxu0 %v325
    %380 = vmatpush.xpose.msra.mxu0 %v322
    %381 = vmatpush.xpose.msra.mxu0 %v319
    %382 = vmatmul.f32.gmra.mxu0 %v316
    %v383 = vpop.f32.mrf.mxu0
    %v384 = vadd.f32 %v313, %v383
    %385 = vdwg.mxu0
    %v386 = vxor.u32 %v384, 2147483648
    %v387 = vmul.f32 %v386, 1.442695
    %v388 = vpow.pop %v387
    %v389 = vadd.f32 %v388, 1.0
    %v390 = vrcp.pop %v389
    %v391 = vmul.f32 %v389, %v390
    %v392 = vsub.f32 1.0, %v391
    %v393 = vmul.f32 %v390, %v392
    %v394 = vadd.f32 %v390, %v393
    %vm395 = vweird.f32 %v389
    %vm396 = vweird.f32 %v390
    %vm397 = vmor %vm395, %vm396
    %v398 = vsel %vm397, %v390, %v394
    %v399 = vand.u32 2147483647, %v389
    %vm400 = vcmp.eq.f32.partialorder %v399, 8.507059e+37
    %v401 = vand.u32 %v389, 2147483648
    %v402 = vor.u32 1.1754944e-38, %v401
    %v403 = vsel %vm400, %v402, %v398
    %v404 = vmul.f32 1.0, %v403
    %405 = vst [vmem:[#allocation3] sm:$0x1] %v404
    // Predicated region
    $region30: #{tpu_custom_call.1} parent=1 // pred_check
      _
    $region31: #{tpu_custom_call.1} parent=1 // pred_check_branch
      %407 = sbr.rel (0) target = $region33
    $region32: #{tpu_custom_call.1} parent=1 // pred_region
      %409 = vsyncadd [#allocation4], 0
      %s411 = sshll.u32 [#allocation3], 4
      %s412 = int_to_ptr.vmem [resolvable:$true] %s411
      %s413 = sshll.u32 %s7, 4
      %s414 = int_to_ptr.hbm [resolvable:$true] %s413
      %416 = dma.vmem_to_hbm [thread:$0]  %s412, 16, %s414, [#allocation4]
    $region33: #{tpu_custom_call.1} parent=1 // pred_fallthru
      _
    // Predicated region
    $region34: #{tpu_custom_call.1} parent=1 // pred_check
      _
    $region35: #{tpu_custom_call.1} parent=1 // pred_check_branch
      %418 = sbr.rel (0) target = $region37
    $region36: #{tpu_custom_call.1} parent=1 // pred_region
      %420 = dma.done [#allocation4], 16
    $region37: #{tpu_custom_call.1} parent=1 // pred_fallthru
      _
    %421 = vsyncpa [#allocation4], 1

</llo_original>
